<compile_context>
chip_gen: v5e
topology: v5e:2x2
jax: 0.10.0
libtpu: 0.0.40
codegen_flags: <defaults>
</compile_context>

<pallas_src>
import jax
import jax.numpy as jnp
from jax import lax
from jax.experimental import pallas as pl
from jax.experimental.pallas import tpu as pltpu


def _pick_tile(n, pref):
    """Largest tile <= pref that divides n and keeps (8,128)-friendly blocks.

    Falls back to the full extent (a full-extent block always satisfies the
    block-shape rule, regardless of divisibility).
    """
    if n % pref == 0:
        return pref
    for t in (512, 384, 256, 128, 64, 32, 16, 8):
        if t <= pref and n % t == 0:
            return t
    return n


# ---------------------------------------------------------------------------
# Kernel 1: per-head QKV projection.
#   x:(B,N,C) @ Wq/Wk/Wv:(H,C,hd)  ->  q,k,v:(B,H,N,hd)
# ---------------------------------------------------------------------------
def _qkv_kernel(x_ref, wq_ref, wk_ref, wv_ref, q_ref, k_ref, v_ref):
    x = x_ref[0]                                            # (Tn, C)
    q_ref[0, 0] = jnp.dot(x, wq_ref[0],
                          preferred_element_type=jnp.float32).astype(q_ref.dtype)
    k_ref[0, 0] = jnp.dot(x, wk_ref[0],
                          preferred_element_type=jnp.float32).astype(k_ref.dtype)
    v_ref[0, 0] = jnp.dot(x, wv_ref[0],
                          preferred_element_type=jnp.float32).astype(v_ref.dtype)


def _qkv_project(x, wq, wk, wv, *, tn):
    B, N, C = x.shape
    H, _, hd = wq.shape
    qkv_shape = jax.ShapeDtypeStruct((B, H, N, hd), x.dtype)
    w_spec = pl.BlockSpec((1, C, hd), lambda b, i, h: (h, 0, 0))
    o_spec = pl.BlockSpec((1, 1, tn, hd), lambda b, i, h: (b, h, i, 0))
    return pl.pallas_call(
        _qkv_kernel,
        out_shape=(qkv_shape, qkv_shape, qkv_shape),
        grid_spec=pltpu.PrefetchScalarGridSpec(
            num_scalar_prefetch=0,
            grid=(B, N // tn, H),
            in_specs=[
                pl.BlockSpec((1, tn, C), lambda b, i, h: (b, i, 0)),
                w_spec, w_spec, w_spec,
            ],
            out_specs=(o_spec, o_spec, o_spec),
        ),
        compiler_params=pltpu.CompilerParams(
            dimension_semantics=("parallel", "parallel", "parallel")),
    )(x, wq, wk, wv)


# ---------------------------------------------------------------------------
# Kernel 2: flash attention (online softmax) + per-head projection accumulate.
#   grid = (B, Nq_tiles, H, Nkv_tiles); output (B, N, C) written once per
#   (b, q-tile) on the last (h, kv) step.
# ---------------------------------------------------------------------------
def _flash_kernel(q_ref, k_ref, v_ref, wp_ref, bp_ref, o_ref,
                  m_sc, l_sc, acc_sc, proj_sc):
    h = pl.program_id(2)
    kv = pl.program_id(3)
    last_h = pl.num_programs(2) - 1
    last_kv = pl.num_programs(3) - 1

    @pl.when(kv == 0)
    def _():
        m_sc[...] = jnp.full_like(m_sc, -jnp.inf)
        l_sc[...] = jnp.zeros_like(l_sc)
        acc_sc[...] = jnp.zeros_like(acc_sc)

    @pl.when(jnp.logical_and(h == 0, kv == 0))
    def _():
        proj_sc[...] = jnp.zeros_like(proj_sc)

    q = q_ref[0, 0]                                         # (Tq, hd)  (scale folded in)
    k = k_ref[0, 0]                                         # (Tk, hd)
    v = v_ref[0, 0]                                         # (Tk, hd)

    # (Tq, Tk) scores without materializing k.T (contract last dims).
    s = lax.dot_general(q, k, (((1,), (1,)), ((), ())),
                        preferred_element_type=jnp.float32)

    m_prev = m_sc[...]
    m_new = jnp.maximum(m_prev, jnp.max(s, axis=-1, keepdims=True))
    alpha = jnp.exp(m_prev - m_new)
    p = jnp.exp(s - m_new)
    l_sc[...] = alpha * l_sc[...] + jnp.sum(p, axis=-1, keepdims=True)
    acc_sc[...] = alpha * acc_sc[...] + jnp.dot(
        p.astype(v.dtype), v, preferred_element_type=jnp.float32)
    m_sc[...] = m_new

    @pl.when(kv == last_kv)
    def _():
        # Finalize this head and accumulate its projection contribution.
        head_out = acc_sc[...] * pl.reciprocal(l_sc[...], approx=True)
        proj_sc[...] += jnp.dot(head_out.astype(wp_ref.dtype), wp_ref[0],
                                preferred_element_type=jnp.float32)

    @pl.when(jnp.logical_and(h == last_h, kv == last_kv))
    def _():
        o_ref[0] = (proj_sc[...] + bp_ref[...]).astype(o_ref.dtype)


def _flash_attention_proj(q, k, v, wp, bp, *, out_dtype, tq, tk):
    B, H, N, hd = q.shape
    C = wp.shape[-1]
    return pl.pallas_call(
        _flash_kernel,
        out_shape=jax.ShapeDtypeStruct((B, N, C), out_dtype),
        grid_spec=pltpu.PrefetchScalarGridSpec(
            num_scalar_prefetch=0,
            grid=(B, N // tq, H, N // tk),
            in_specs=[
                pl.BlockSpec((1, 1, tq, hd), lambda b, qi, h, kv: (b, h, qi, 0)),
                pl.BlockSpec((1, 1, tk, hd), lambda b, qi, h, kv: (b, h, kv, 0)),
                pl.BlockSpec((1, 1, tk, hd), lambda b, qi, h, kv: (b, h, kv, 0)),
                pl.BlockSpec((1, hd, C), lambda b, qi, h, kv: (h, 0, 0)),
                pl.BlockSpec((1, C), lambda b, qi, h, kv: (0, 0)),
            ],
            out_specs=pl.BlockSpec((1, tq, C), lambda b, qi, h, kv: (b, qi, 0)),
            scratch_shapes=[
                pltpu.VMEM((tq, 1), jnp.float32),     # running max
                pltpu.VMEM((tq, 1), jnp.float32),     # running denom
                pltpu.VMEM((tq, hd), jnp.float32),    # per-head accumulator
                pltpu.VMEM((tq, C), jnp.float32),     # projection accumulator
            ],
        ),
        compiler_params=pltpu.CompilerParams(
            dimension_semantics=("parallel", "parallel", "arbitrary", "arbitrary")),
    )(q, k, v, wp, bp)


def self_attention(x, w_qkv, w_proj, b_proj, *, num_heads, qk_scale=None):
    """x: (B, N, C); w_qkv: (C, 3C) pre-transposed; w_proj: (C, C); b_proj: (C,)."""
    B, N, C = x.shape
    assert C % num_heads == 0, "dim must be divisible by num_heads"
    hd = C // num_heads
    scale = qk_scale if qk_scale is not None else hd ** (-0.5)

    # Weight prep (trace-time, fused by XLA): head-major weights, softmax
    # scale folded into Wq so the attention kernel does no extra multiply.
    w3 = w_qkv.reshape(C, 3, num_heads, hd).transpose(1, 2, 0, 3)   # (3,H,C,hd)
    wq = w3[0] * jnp.asarray(scale, dtype=w3.dtype)
    wk = w3[1]
    wv = w3[2]
    wp = w_proj.reshape(num_heads, hd, C)                           # (H,hd,C)
    bp = b_proj.reshape(1, C).astype(jnp.float32)

    tn = _pick_tile(N, 256)
    tq = _pick_tile(N, 128)
    tk = _pick_tile(N, 128)

    q, k, v = _qkv_project(x, wq, wk, wv, tn=tn)
    return _flash_attention_proj(q, k, v, wp, bp, out_dtype=x.dtype, tq=tq, tk=tk)


# ---------------------------------------------------------------------------
# Pure-JAX reference (mirrors the PyTorch module forward, dropout p=0).
# ---------------------------------------------------------------------------
def _reference(x, w_qkv, w_proj, b_proj, num_heads):
    B, N, C = x.shape
    hd = C // num_heads
    scale = hd ** (-0.5)
    qkv = x @ w_qkv                                     # (B, N, 3C)
    qkv = qkv.reshape(B, N, 3, num_heads, hd).transpose(2, 0, 3, 1, 4)
    q, k, v = qkv[0], qkv[1], qkv[2]                    # (B, H, N, hd)
    attn = (q @ jnp.swapaxes(k, -2, -1)) * scale
    attn = jax.nn.softmax(attn, axis=-1)
    out = (attn @ v).transpose(0, 2, 1, 3).reshape(B, N, C)
    return out @ w_proj + b_proj


if __name__ == "__main__":
    B, N, C = 2, 8, 32
    num_heads = 2

    key = jax.random.PRNGKey(0)
    k1, k2, k3, k4 = jax.random.split(key, 4)
    x = jax.random.normal(k1, (B, N, C), dtype=jnp.float32)
    # deterministic synthetic parameters (qkv_bias=False in the module)
    w_qkv = jax.random.normal(k2, (C, 3 * C), dtype=jnp.float32) * (1.0 / C ** 0.5)
    w_proj = jax.random.normal(k3, (C, C), dtype=jnp.float32) * (1.0 / C ** 0.5)
    b_proj = jax.random.normal(k4, (C,), dtype=jnp.float32) * 0.01

    out = self_attention(x, w_qkv, w_proj, b_proj, num_heads=num_heads)
    out = jax.block_until_ready(out)

    ref = _reference(x, w_qkv, w_proj, b_proj, num_heads)
    # tolerance accounts for the approx (EUP) reciprocal in the softmax denom
    assert out.shape == ref.shape, "shape mismatch vs reference"
    assert jnp.allclose(out, ref, atol=1e-2, rtol=1e-2), "mismatch vs reference"

    print("KERNEL_OK")
</pallas_src>

<mosaic_0001>
module attributes {stable_mosaic.version = 11 : i64} {
  func.func @_qkv_kernel(%arg0: i32, %arg1: i32, %arg2: i32, %arg3: memref<1x8x32xf32, #tpu.memory_space<vmem>>, %arg4: memref<1x32x16xf32, #tpu.memory_space<vmem>>, %arg5: memref<1x32x16xf32, #tpu.memory_space<vmem>>, %arg6: memref<1x32x16xf32, #tpu.memory_space<vmem>>, %arg7: memref<1x1x8x16xf32, #tpu.memory_space<vmem>>, %arg8: memref<1x1x8x16xf32, #tpu.memory_space<vmem>>, %arg9: memref<1x1x8x16xf32, #tpu.memory_space<vmem>>) attributes {dimension_semantics = [#tpu.dimension_semantics<parallel>, #tpu.dimension_semantics<parallel>, #tpu.dimension_semantics<parallel>], iteration_bounds = array<i64: 2, 1, 2>, scalar_prefetch = 0 : i64, scratch_operands = 0 : i64, tpu.core_type = #tpu.core_type<tc>, window_params = [{transform_indices = @transform_0, window_bounds = array<i64: 1, 8, 32>}, {transform_indices = @transform_1, window_bounds = array<i64: 1, 32, 16>}, {transform_indices = @transform_2, window_bounds = array<i64: 1, 32, 16>}, {transform_indices = @transform_3, window_bounds = array<i64: 1, 32, 16>}, {transform_indices = @transform_4, window_bounds = array<i64: 1, 1, 8, 16>}, {transform_indices = @transform_5, window_bounds = array<i64: 1, 1, 8, 16>}, {transform_indices = @transform_6, window_bounds = array<i64: 1, 1, 8, 16>}]} {
    %c0 = arith.constant 0 : index
    %c0_0 = arith.constant 0 : index
    %c0_1 = arith.constant 0 : index
    %0 = vector.load %arg3[%c0, %c0_0, %c0_1] : memref<1x8x32xf32, #tpu.memory_space<vmem>>, vector<1x8x32xf32>
    %1 = vector.shape_cast %0 : vector<1x8x32xf32> to vector<8x32xf32>
    %c0_2 = arith.constant 0 : index
    %c0_3 = arith.constant 0 : index
    %c0_4 = arith.constant 0 : index
    %2 = vector.load %arg4[%c0_2, %c0_3, %c0_4] : memref<1x32x16xf32, #tpu.memory_space<vmem>>, vector<1x32x16xf32>
    %3 = vector.shape_cast %2 : vector<1x32x16xf32> to vector<32x16xf32>
    %cst = arith.constant dense<0.000000e+00> : vector<8x16xf32>
    %4 = tpu.matmul %1, %3, %cst {dimension_numbers = #tpu.dot_dimension_numbers<[1], [0], [0], [1], [0, 0, 1, 1], [], []>} : vector<8x32xf32>, vector<32x16xf32>, vector<8x16xf32> -> vector<8x16xf32>
    %c0_5 = arith.constant 0 : index
    %c0_6 = arith.constant 0 : index
    %c0_7 = arith.constant 0 : index
    %c0_8 = arith.constant 0 : index
    %5 = vector.load %arg7[%c0_5, %c0_6, %c0_7, %c0_8] : memref<1x1x8x16xf32, #tpu.memory_space<vmem>>, vector<1x1x8x16xf32>
    %6 = vector.shape_cast %5 : vector<1x1x8x16xf32> to vector<8x16xf32>
    %7 = vector.shape_cast %4 : vector<8x16xf32> to vector<1x1x8x16xf32>
    tpu.vector_store %arg7[%c0_5, %c0_6, %c0_7, %c0_8], %7 {strides = array<i32>} : memref<1x1x8x16xf32, #tpu.memory_space<vmem>>, vector<1x1x8x16xf32>,
    %c0_9 = arith.constant 0 : index
    %c0_10 = arith.constant 0 : index
    %c0_11 = arith.constant 0 : index
    %8 = vector.load %arg5[%c0_9, %c0_10, %c0_11] : memref<1x32x16xf32, #tpu.memory_space<vmem>>, vector<1x32x16xf32>
    %9 = vector.shape_cast %8 : vector<1x32x16xf32> to vector<32x16xf32>
    %cst_12 = arith.constant dense<0.000000e+00> : vector<8x16xf32>
    %10 = tpu.matmul %1, %9, %cst_12 {dimension_numbers = #tpu.dot_dimension_numbers<[1], [0], [0], [1], [0, 0, 1, 1], [], []>} : vector<8x32xf32>, vector<32x16xf32>, vector<8x16xf32> -> vector<8x16xf32>
    %c0_13 = arith.constant 0 : index
    %c0_14 = arith.constant 0 : index
    %c0_15 = arith.constant 0 : index
    %c0_16 = arith.constant 0 : index
    %11 = vector.load %arg8[%c0_13, %c0_14, %c0_15, %c0_16] : memref<1x1x8x16xf32, #tpu.memory_space<vmem>>, vector<1x1x8x16xf32>
    %12 = vector.shape_cast %11 : vector<1x1x8x16xf32> to vector<8x16xf32>
    %13 = vector.shape_cast %10 : vector<8x16xf32> to vector<1x1x8x16xf32>
    tpu.vector_store %arg8[%c0_13, %c0_14, %c0_15, %c0_16], %13 {strides = array<i32>} : memref<1x1x8x16xf32, #tpu.memory_space<vmem>>, vector<1x1x8x16xf32>,
    %c0_17 = arith.constant 0 : index
    %c0_18 = arith.constant 0 : index
    %c0_19 = arith.constant 0 : index
    %14 = vector.load %arg6[%c0_17, %c0_18, %c0_19] : memref<1x32x16xf32, #tpu.memory_space<vmem>>, vector<1x32x16xf32>
    %15 = vector.shape_cast %14 : vector<1x32x16xf32> to vector<32x16xf32>
    %cst_20 = arith.constant dense<0.000000e+00> : vector<8x16xf32>
    %16 = tpu.matmul %1, %15, %cst_20 {dimension_numbers = #tpu.dot_dimension_numbers<[1], [0], [0], [1], [0, 0, 1, 1], [], []>} : vector<8x32xf32>, vector<32x16xf32>, vector<8x16xf32> -> vector<8x16xf32>
    %c0_21 = arith.constant 0 : index
    %c0_22 = arith.constant 0 : index
    %c0_23 = arith.constant 0 : index
    %c0_24 = arith.constant 0 : index
    %17 = vector.load %arg9[%c0_21, %c0_22, %c0_23, %c0_24] : memref<1x1x8x16xf32, #tpu.memory_space<vmem>>, vector<1x1x8x16xf32>
    %18 = vector.shape_cast %17 : vector<1x1x8x16xf32> to vector<8x16xf32>
    %19 = vector.shape_cast %16 : vector<8x16xf32> to vector<1x1x8x16xf32>
    tpu.vector_store %arg9[%c0_21, %c0_22, %c0_23, %c0_24], %19 {strides = array<i32>} : memref<1x1x8x16xf32, #tpu.memory_space<vmem>>, vector<1x1x8x16xf32>,
    return
  }
  func.func @transform_0(%arg0: i32, %arg1: i32, %arg2: i32) -> (i32, i32, i32) {
    %c0_i32 = arith.constant 0 : i32
    %c0_i32_0 = arith.constant 0 : i32
    return %arg0, %arg1, %c0_i32 : i32, i32, i32
  }
  func.func @transform_1(%arg0: i32, %arg1: i32, %arg2: i32) -> (i32, i32, i32) {
    %c0_i32 = arith.constant 0 : i32
    %c0_i32_0 = arith.constant 0 : i32
    %c0_i32_1 = arith.constant 0 : i32
    return %arg2, %c0_i32, %c0_i32_0 : i32, i32, i32
  }
  func.func @transform_2(%arg0: i32, %arg1: i32, %arg2: i32) -> (i32, i32, i32) {
    %c0_i32 = arith.constant 0 : i32
    %c0_i32_0 = arith.constant 0 : i32
    %c0_i32_1 = arith.constant 0 : i32
    return %arg2, %c0_i32, %c0_i32_0 : i32, i32, i32
  }
  func.func @transform_3(%arg0: i32, %arg1: i32, %arg2: i32) -> (i32, i32, i32) {
    %c0_i32 = arith.constant 0 : i32
    %c0_i32_0 = arith.constant 0 : i32
    %c0_i32_1 = arith.constant 0 : i32
    return %arg2, %c0_i32, %c0_i32_0 : i32, i32, i32
  }
  func.func @transform_4(%arg0: i32, %arg1: i32, %arg2: i32) -> (i32, i32, i32, i32) {
    %c0_i32 = arith.constant 0 : i32
    %c0_i32_0 = arith.constant 0 : i32
    return %arg0, %arg2, %arg1, %c0_i32 : i32, i32, i32, i32
  }
  func.func @transform_5(%arg0: i32, %arg1: i32, %arg2: i32) -> (i32, i32, i32, i32) {
    %c0_i32 = arith.constant 0 : i32
    %c0_i32_0 = arith.constant 0 : i32
    return %arg0, %arg2, %arg1, %c0_i32 : i32, i32, i32, i32
  }
  func.func @transform_6(%arg0: i32, %arg1: i32, %arg2: i32) -> (i32, i32, i32, i32) {
    %c0_i32 = arith.constant 0 : i32
    %c0_i32_0 = arith.constant 0 : i32
    return %arg0, %arg2, %arg1, %c0_i32 : i32, i32, i32, i32
  }
}

</mosaic_0001>

<llo_original>
// kernel: tpu_custom_call.1
$region0: #{tpu_custom_call.1}
  #allocation0 [shape = 'u32[]', space=smem, size = 0x4, offset = 0x4, fixed_abs, tag = 'smem constant byte address 0x4 - core index']
  #allocation1 [shape = 'u32[72,128]{1,0:T(1,128)}', space=vmem, size = 0x9000, scoped, tag = 'internal scratch']
  %s0 = inlined_call_operand.vmem [shape: f32[2,8,32], index: 0, kind: input, shape index: {}]
  %s1 = inlined_call_operand.vmem [shape: f32[2,32,16], index: 1, kind: input, shape index: {}]
  %s2 = inlined_call_operand.vmem [shape: f32[2,32,16], index: 2, kind: input, shape index: {}]
  %s3 = inlined_call_operand.vmem [shape: f32[2,32,16], index: 3, kind: input, shape index: {}]
  %s4 = inlined_call_operand.hbm [shape: f32[2,2,8,16], index: 4, kind: output, shape index: {0}]
  %s5 = inlined_call_operand.hbm [shape: f32[2,2,8,16], index: 5, kind: output, shape index: {1}]
  %s6 = inlined_call_operand.hbm [shape: f32[2,2,8,16], index: 6, kind: output, shape index: {2}]
  %7 = xla_tuple %s4, %s5, %s6
  %s8 = sld [smem:[#allocation0]]
  $region65: #{tpu_custom_call.1} parent=0
    _
  %s10 = ssub.s32 1, %s8
  %s11 = scalar_select 0, %s10, %s8
  $region1: #{tpu_custom_call.1} parent=0
    #allocation2 [shape = 'u8[8192]{0}', space=vmem, size = 0x2000, scoped, tag = 'output window, operand 0']
    #allocation3 [shape = 's32[2]{0}', space=sflag, size = 0x8, scoped, tag = 'scoped memory for tpu_custom_call.1']
    #allocation4 [shape = 'u8[8192]{0}', space=vmem, size = 0x2000, scoped, tag = 'output window, operand 1']
    #allocation5 [shape = 's32[2]{0}', space=sflag, size = 0x8, scoped, tag = 'scoped memory for tpu_custom_call.1']
    #allocation6 [shape = 'u8[8192]{0}', space=vmem, size = 0x2000, scoped, tag = 'output window, operand 2']
    %12 = vsyncpa [#allocation3], 0
    %s13 = scalar_lea.sflag [#allocation3], 1
    %14 = vsyncpa %s13, 0
    %15 = vsyncpa [#allocation5], 0
    %s16 = scalar_lea.sflag [#allocation5], 1
    %17 = vsyncpa %s16, 0
    loop: start=0, step=1, limit=6
    $region2: #{tpu_custom_call.1} parent=1 // loop_pre_header
      _
    $region3: #{tpu_custom_call.1} parent=1 // loop_header
      %s19 = sphi 0, %s23
      %p20 = scmp.ge.s32.totalorder %s19, 6
      %s26 = sphi 0, %s45
      %s27 = sphi 0, %s41
      %s28 = sphi 0, %s37
      %s29 = sphi 0, %s26
      %s30 = sphi 0, %s27
      %s31 = sphi 0, %s28
      %s32 = sphi 0, %s29
      %s33 = sphi 0, %s30
      %s34 = sphi 0, %s31
      %s50 = sphi 0, %s52
      %s53 = sphi 0, %s50
      %s54 = sphi 0, %s53
      %s70 = sphi 0, %s54
      %s76 = sphi 0, %s78
      %s79 = sphi 0, %s76
      %s80 = sphi 0, %s79
      %s96 = sphi 0, %s80
      %s102 = sphi 0, %s104
      %s105 = sphi 0, %s102
      %s106 = sphi 0, %s105
      %s122 = sphi 0, %s106
      %s128 = sphi 0, %s130
      %s131 = sphi 0, %s128
      %s132 = sphi 0, %s131
      %s148 = sphi 0, %s132
      %s158 = sphi 0, %s160
      %s161 = sphi 0, %s158
      %s162 = sphi 0, %s161
      %s178 = sphi 0, %s162
      %s188 = sphi 0, %s190
      %s191 = sphi 0, %s188
      %s192 = sphi 0, %s191
      %s208 = sphi 0, %s192
      %s218 = sphi 0, %s220
      %s221 = sphi 0, %s218
      %s222 = sphi 0, %s221
      %s238 = sphi 0, %s222
    $region4: #{tpu_custom_call.1} parent=1 // loop_header_branch
      %22 = sbr.rel (%p20) target = $region8
    $region5: #{tpu_custom_call.1} parent=1 // loop_body
      %s24 = ssub.s32 %s19, 1
      %s25 = ssub.s32 %s19, 2
      %s35 = sadd.s32 1, %s28
      %p36 = scmp.ge.s32.totalorder %s35, 2
      %s37 = scalar_select %p36, 0, %s35
      %s38 = sadd.s32 1, %s27
      %s39 = scalar_select %p36, %s38, %s27
      %p40 = scmp.ge.s32.totalorder %s39, 1
      %s41 = scalar_select %p40, 0, %s39
      %s42 = sadd.s32 1, %s26
      %s43 = scalar_select %p40, %s42, %s26
      %p44 = scmp.ge.s32.totalorder %s43, 2
      %s45 = scalar_select %p44, 0, %s43
      %s46 = ssub.s32 %s26, %s45
      %s47 = ssub.s32 %s27, %s41
      %s48 = sor.u32 %s46, %s47
      %p49 = scmp.eq.s32.totalorder %s48, 0
      %s51 = sadd.s32 %s50, 1
      %s52 = scalar_select %p49, %s50, %s51
      %p55 = pneg %p49
      %p56 = scmp.eq.s32.totalorder %s19, 3
      %p57 = por %p55, %p56
      %p58 = scmp.ne.s32.totalorder %s50, %s53
      %p59 = scmp.eq.s32.totalorder %s19, 0
      %p60 = por %p58, %p59
      %p61 = scmp.ne.s32.totalorder %s50, %s53
      %p62 = scmp.eq.s32.totalorder %s24, 3
      %p63 = por %p61, %p62
      %p64 = scmp.ne.s32.totalorder %s53, %s54
      %p65 = scmp.eq.s32.totalorder %s24, 0
      %p66 = por %p64, %p65
      %p67 = scmp.ne.s32.totalorder %s53, %s54
      %p68 = scmp.eq.s32.totalorder %s25, 3
      %p69 = por %p67, %p68
      %p71 = scmp.ne.s32.totalorder %s54, %s70
      %p72 = scmp.eq.s32.totalorder %s25, 0
      %p73 = por %p71, %p72
      %s74 = ssub.s32 %s28, %s37
      %p75 = scmp.eq.s32.totalorder %s74, 0
      %s77 = sadd.s32 %s76, 1
      %s78 = scalar_select %p75, %s76, %s77
      %p81 = pneg %p75
      %p82 = scmp.eq.s32.totalorder %s19, 3
      %p83 = por %p81, %p82
      %p84 = scmp.ne.s32.totalorder %s76, %s79
      %p85 = scmp.eq.s32.totalorder %s19, 0
      %p86 = por %p84, %p85
      %p87 = scmp.ne.s32.totalorder %s76, %s79
      %p88 = scmp.eq.s32.totalorder %s24, 3
      %p89 = por %p87, %p88
      %p90 = scmp.ne.s32.totalorder %s79, %s80
      %p91 = scmp.eq.s32.totalorder %s24, 0
      %p92 = por %p90, %p91
      %p93 = scmp.ne.s32.totalorder %s79, %s80
      %p94 = scmp.eq.s32.totalorder %s25, 3
      %p95 = por %p93, %p94
      %p97 = scmp.ne.s32.totalorder %s80, %s96
      %p98 = scmp.eq.s32.totalorder %s25, 0
      %p99 = por %p97, %p98
      %s100 = ssub.s32 %s28, %s37
      %p101 = scmp.eq.s32.totalorder %s100, 0
      %s103 = sadd.s32 %s102, 1
      %s104 = scalar_select %p101, %s102, %s103
      %p107 = pneg %p101
      %p108 = scmp.eq.s32.totalorder %s19, 3
      %p109 = por %p107, %p108
      %p110 = scmp.ne.s32.totalorder %s102, %s105
      %p111 = scmp.eq.s32.totalorder %s19, 0
      %p112 = por %p110, %p111
      %p113 = scmp.ne.s32.totalorder %s102, %s105
      %p114 = scmp.eq.s32.totalorder %s24, 3
      %p115 = por %p113, %p114
      %p116 = scmp.ne.s32.totalorder %s105, %s106
      %p117 = scmp.eq.s32.totalorder %s24, 0
      %p118 = por %p116, %p117
      %p119 = scmp.ne.s32.totalorder %s105, %s106
      %p120 = scmp.eq.s32.totalorder %s25, 3
      %p121 = por %p119, %p120
      %p123 = scmp.ne.s32.totalorder %s106, %s122
      %p124 = scmp.eq.s32.totalorder %s25, 0
      %p125 = por %p123, %p124
      %s126 = ssub.s32 %s28, %s37
      %p127 = scmp.eq.s32.totalorder %s126, 0
      %s129 = sadd.s32 %s128, 1
      %s130 = scalar_select %p127, %s128, %s129
      %p133 = pneg %p127
      %p134 = scmp.eq.s32.totalorder %s19, 3
      %p135 = por %p133, %p134
      %p136 = scmp.ne.s32.totalorder %s128, %s131
      %p137 = scmp.eq.s32.totalorder %s19, 0
      %p138 = por %p136, %p137
      %p139 = scmp.ne.s32.totalorder %s128, %s131
      %p140 = scmp.eq.s32.totalorder %s24, 3
      %p141 = por %p139, %p140
      %p142 = scmp.ne.s32.totalorder %s131, %s132
      %p143 = scmp.eq.s32.totalorder %s24, 0
      %p144 = por %p142, %p143
      %p145 = scmp.ne.s32.totalorder %s131, %s132
      %p146 = scmp.eq.s32.totalorder %s25, 3
      %p147 = por %p145, %p146
      %p149 = scmp.ne.s32.totalorder %s132, %s148
      %p150 = scmp.eq.s32.totalorder %s25, 0
      %p151 = por %p149, %p150
      %s152 = ssub.s32 %s26, %s45
      %s153 = ssub.s32 %s28, %s37
      %s154 = sor.u32 %s152, %s153
      %s155 = ssub.s32 %s27, %s41
      %s156 = sor.u32 %s154, %s155
      %p157 = scmp.eq.s32.totalorder %s156, 0
      %s159 = sadd.s32 %s158, 1
      %s160 = scalar_select %p157, %s158, %s159
      %p163 = pneg %p157
      %p164 = scmp.eq.s32.totalorder %s19, 3
      %p165 = por %p163, %p164
      %p166 = scmp.ne.s32.totalorder %s158, %s161
      %p167 = scmp.eq.s32.totalorder %s19, 0
      %p168 = por %p166, %p167
      %p169 = scmp.ne.s32.totalorder %s158, %s161
      %p170 = scmp.eq.s32.totalorder %s24, 3
      %p171 = por %p169, %p170
      %p172 = scmp.ne.s32.totalorder %s161, %s162
      %p173 = scmp.eq.s32.totalorder %s24, 0
      %p174 = por %p172, %p173
      %p175 = scmp.ne.s32.totalorder %s161, %s162
      %p176 = scmp.eq.s32.totalorder %s25, 3
      %p177 = por %p175, %p176
      %p179 = scmp.ne.s32.totalorder %s162, %s178
      %p180 = scmp.eq.s32.totalorder %s25, 0
      %p181 = por %p179, %p180
      %s182 = ssub.s32 %s26, %s45
      %s183 = ssub.s32 %s28, %s37
      %s184 = sor.u32 %s182, %s183
      %s185 = ssub.s32 %s27, %s41
      %s186 = sor.u32 %s184, %s185
      %p187 = scmp.eq.s32.totalorder %s186, 0
      %s189 = sadd.s32 %s188, 1
      %s190 = scalar_select %p187, %s188, %s189
      %p193 = pneg %p187
      %p194 = scmp.eq.s32.totalorder %s19, 3
      %p195 = por %p193, %p194
      %p196 = scmp.ne.s32.totalorder %s188, %s191
      %p197 = scmp.eq.s32.totalorder %s19, 0
      %p198 = por %p196, %p197
      %p199 = scmp.ne.s32.totalorder %s188, %s191
      %p200 = scmp.eq.s32.totalorder %s24, 3
      %p201 = por %p199, %p200
      %p202 = scmp.ne.s32.totalorder %s191, %s192
      %p203 = scmp.eq.s32.totalorder %s24, 0
      %p204 = por %p202, %p203
      %p205 = scmp.ne.s32.totalorder %s191, %s192
      %p206 = scmp.eq.s32.totalorder %s25, 3
      %p207 = por %p205, %p206
      %p209 = scmp.ne.s32.totalorder %s192, %s208
      %p210 = scmp.eq.s32.totalorder %s25, 0
      %p211 = por %p209, %p210
      %s212 = ssub.s32 %s26, %s45
      %s213 = ssub.s32 %s28, %s37
      %s214 = sor.u32 %s212, %s213
      %s215 = ssub.s32 %s27, %s41
      %s216 = sor.u32 %s214, %s215
      %p217 = scmp.eq.s32.totalorder %s216, 0
      %s219 = sadd.s32 %s218, 1
      %s220 = scalar_select %p217, %s218, %s219
      %p223 = pneg %p217
      %p224 = scmp.eq.s32.totalorder %s19, 3
      %p225 = por %p223, %p224
      %p226 = scmp.ne.s32.totalorder %s218, %s221
      %p227 = scmp.eq.s32.totalorder %s19, 0
      %p228 = por %p226, %p227
      %p229 = scmp.ne.s32.totalorder %s218, %s221
      %p230 = scmp.eq.s32.totalorder %s24, 3
      %p231 = por %p229, %p230
      %p232 = scmp.ne.s32.totalorder %s221, %s222
      %p233 = scmp.eq.s32.totalorder %s24, 0
      %p234 = por %p232, %p233
      %p235 = scmp.ne.s32.totalorder %s221, %s222
      %p236 = scmp.eq.s32.totalorder %s25, 3
      %p237 = por %p235, %p236
      %p239 = scmp.ne.s32.totalorder %s222, %s238
      %p240 = scmp.eq.s32.totalorder %s25, 0
      %p241 = por %p239, %p240
      %p242 = scmp.le.s32.totalorder 1, %s19
      %p243 = scmp.lt.s32.totalorder %s19, 5
      %p244 = pnand %p242, %p243
      %p245 = pneg %p244
      // Predicated region
      $region9: #{tpu_custom_call.1} parent=5 // pred_check
        _
      $region10: #{tpu_custom_call.1} parent=5 // pred_check_branch
        %247 = sbr.rel (%p244) target = $region12
      $region11: #{tpu_custom_call.1} parent=5 // pred_region
        %s248 = ssub.s32 %s19, 1
      $region12: #{tpu_custom_call.1} parent=5 // pred_fallthru
        _
      %p249 = scmp.lt.s32.totalorder %s19, 4
      // Predicated region
      $region13: #{tpu_custom_call.1} parent=5 // pred_check
        %p250 = pneg %p249
      $region14: #{tpu_custom_call.1} parent=5 // pred_check_branch
        %252 = sbr.rel (%p250) target = $region16
      $region15: #{tpu_custom_call.1} parent=5 // pred_region
        // Predicated region
        $region17: #{tpu_custom_call.1} parent=15 // pred_check
          %p253 = pneg %p60
        $region18: #{tpu_custom_call.1} parent=15 // pred_check_branch
          %255 = sbr.rel (%p253) target = $region20
        $region19: #{tpu_custom_call.1} parent=15 // pred_region
          %p256 = scmp.lt.s32.totalorder %s26, 1
          %s257 = scalar_select %p256, %s26, 1
          %p258 = scmp.lt.s32.totalorder %s27, 0
          %s259 = scalar_select %p258, %s27, 0
          %s260 = sadd.s32 %s259, %s257
          %s261 = smul.addr %s260, 8
          %s262 = scalar_lea.vmem %s0, %s261
        $region20: #{tpu_custom_call.1} parent=15 // pred_fallthru
          _
        // Predicated region
        $region21: #{tpu_custom_call.1} parent=15 // pred_check
          %p263 = pneg %p86
        $region22: #{tpu_custom_call.1} parent=15 // pred_check_branch
          %265 = sbr.rel (%p263) target = $region24
        $region23: #{tpu_custom_call.1} parent=15 // pred_region
          %p266 = scmp.lt.s32.totalorder %s28, 1
          %s267 = scalar_select %p266, %s28, 1
          %s268 = smul.addr %s267, 4
          %s269 = smul.addr %s268, 8
          %s270 = scalar_lea.vmem %s1, %s269
        $region24: #{tpu_custom_call.1} parent=15 // pred_fallthru
          _
        // Predicated region
        $region25: #{tpu_custom_call.1} parent=15 // pred_check
          %p271 = pneg %p112
        $region26: #{tpu_custom_call.1} parent=15 // pred_check_branch
          %273 = sbr.rel (%p271) target = $region28
        $region27: #{tpu_custom_call.1} parent=15 // pred_region
          %p274 = scmp.lt.s32.totalorder %s28, 1
          %s275 = scalar_select %p274, %s28, 1
          %s276 = smul.addr %s275, 4
          %s277 = smul.addr %s276, 8
          %s278 = scalar_lea.vmem %s2, %s277
        $region28: #{tpu_custom_call.1} parent=15 // pred_fallthru
          _
        // Predicated region
        $region29: #{tpu_custom_call.1} parent=15 // pred_check
          %p279 = pneg %p138
        $region30: #{tpu_custom_call.1} parent=15 // pred_check_branch
          %281 = sbr.rel (%p279) target = $region32
        $region31: #{tpu_custom_call.1} parent=15 // pred_region
          %p282 = scmp.lt.s32.totalorder %s28, 1
          %s283 = scalar_select %p282, %s28, 1
          %s284 = smul.addr %s283, 4
          %s285 = smul.addr %s284, 8
          %s286 = scalar_lea.vmem %s3, %s285
        $region32: #{tpu_custom_call.1} parent=15 // pred_fallthru
          _
      $region16: #{tpu_custom_call.1} parent=5 // pred_fallthru
        _
      %p287 = scmp.le.s32.totalorder 1, %s19
      %p288 = scmp.lt.s32.totalorder %s19, 5
      %p289 = pnand %p287, %p288
      %p290 = pneg %p289
      // Predicated region
      $region33: #{tpu_custom_call.1} parent=5 // pred_check
        _
      $region34: #{tpu_custom_call.1} parent=5 // pred_check_branch
        %292 = sbr.rel (%p289) target = $region36
      $region35: #{tpu_custom_call.1} parent=5 // pred_region
        %s293 = ssub.s32 %s19, 1
        %p294 = scmp.lt.s32.totalorder %s29, 1
        %s295 = scalar_select %p294, %s29, 1
        %p296 = scmp.lt.s32.totalorder %s30, 0
        %s297 = scalar_select %p296, %s30, 0
        %s298 = sadd.s32 %s297, %s295
        %s299 = smul.addr %s298, 8
        %s300 = scalar_lea.vmem %s0, %s299
        %p301 = pneg %p66
        %p302 = pneg %p63
        %p303 = scmp.lt.s32.totalorder %s31, 1
        %s304 = scalar_select %p303, %s31, 1
        %s305 = smul.addr %s304, 4
        %s306 = smul.addr %s305, 8
        %s307 = scalar_lea.vmem %s1, %s306
        %p308 = pneg %p92
        %p309 = pneg %p89
        %p310 = scmp.lt.s32.totalorder %s31, 1
        %s311 = scalar_select %p310, %s31, 1
        %s312 = smul.addr %s311, 4
        %s313 = smul.addr %s312, 8
        %s314 = scalar_lea.vmem %s2, %s313
        %p315 = pneg %p118
        %p316 = pneg %p115
        %p317 = scmp.lt.s32.totalorder %s31, 1
        %s318 = scalar_select %p317, %s31, 1
        %s319 = smul.addr %s318, 4
        %s320 = smul.addr %s319, 8
        %s321 = scalar_lea.vmem %s3, %s320
        %p322 = pneg %p144
        %p323 = pneg %p141
        %p324 = pneg %p174
        %p325 = pneg %p171
        %s326 = sand.u32 %s161, 1
        %s327 = scalar_lea.sflag [#allocation3], %s326
        %s328 = sand.u32 %s161, 1
        %s329 = smul.addr %s328, 8
        %s330 = scalar_lea.vmem [#allocation2], %s329
        %p331 = pneg %p204
        %p332 = pneg %p201
        %s333 = sand.u32 %s24, 1
        %s334 = scalar_lea.sflag [#allocation5], %s333
        %s335 = sand.u32 %s191, 1
        %s336 = smul.addr %s335, 8
        %s337 = scalar_lea.vmem [#allocation4], %s336
        %p338 = pneg %p234
        %p339 = pneg %p231
        %s340 = sand.u32 %s24, 1
        %s341 = scalar_lea.sflag [#allocation5], %s340
        %s342 = sand.u32 %s221, 1
        %s343 = smul.addr %s342, 8
        %s344 = scalar_lea.vmem [#allocation6], %s343
        %p345 = scmp.lt.s32.totalorder %s29, 1
        %s346 = scalar_select %p345, %s29, 1
        %p347 = scmp.lt.s32.totalorder %s30, 0
        %s348 = scalar_select %p347, %s30, 0
        %s349 = sadd.s32 %s348, %s346
        %s350 = smul.addr %s349, 8
        %s351 = scalar_lea.vmem %s0, %s350
        %p352 = scmp.lt.s32.totalorder %s31, 1
        %s353 = scalar_select %p352, %s31, 1
        %s354 = smul.addr %s353, 4
        %s355 = smul.addr %s354, 8
        %s356 = scalar_lea.vmem %s1, %s355
        %p357 = scmp.lt.s32.totalorder %s31, 1
        %s358 = scalar_select %p357, %s31, 1
        %s359 = smul.addr %s358, 4
        %s360 = smul.addr %s359, 8
        %s361 = scalar_lea.vmem %s2, %s360
        %p362 = scmp.lt.s32.totalorder %s31, 1
        %s363 = scalar_select %p362, %s31, 1
        %s364 = smul.addr %s363, 4
        %s365 = smul.addr %s364, 8
        %s366 = scalar_lea.vmem %s3, %s365
        %v367 = vld [vmem:[%s351] sm:$0xff]
        %v368 = vld [vmem:[%s356] sm:$0xff]
        %v369 = vld [vmem:[%s356 + $0x8] sm:$0xff]
        %v370 = vld [vmem:[%s356 + $0x10] sm:$0xff]
        %v371 = vld [vmem:[%s356 + $0x18] sm:$0xff]
        %vm372 = vcmask 261120
        %v374 = vsel %vm372, %v367, 0
        %376 = vmatpush.msra.mxu0 0.0
        %377 = vmatpush.msra.mxu0 0.0
        %378 = vmatpush.msra.mxu0 0.0
        %379 = vmatpush.msra.mxu0 0.0
        %380 = vmatpush.msra.mxu0 0.0
        %381 = vmatpush.msra.mxu0 0.0
        %382 = vmatpush.msra.mxu0 0.0
        %383 = vmatpush.msra.mxu0 0.0
        %384 = vmatpush.msra.mxu0 0.0
        %385 = vmatpush.msra.mxu0 0.0
        %386 = vmatpush.msra.mxu0 0.0
        %387 = vmatpush.msra.mxu0 0.0
        %388 = vmatpush.msra.mxu0 %v371
        %389 = vmatpush.msra.mxu0 %v370
        %390 = vmatpush.msra.mxu0 %v369
        %391 = vmatpush.msra.mxu0 %v368
        %392 = vmatmul.f32.gmra.mxu0 %v374
        %v393 = vpop.f32.mrf.mxu0
        %v394 = vadd.f32 0.0, %v393
        %395 = vdwg.mxu0
        %vm396 = vcmask 130048
        %397 = vst.msk [vmem:[%s330] sm:$0xff] %vm396, %v394
        %v398 = vld [vmem:[%s361] sm:$0xff]
        %v399 = vld [vmem:[%s361 + $0x8] sm:$0xff]
        %v400 = vld [vmem:[%s361 + $0x10] sm:$0xff]
        %v401 = vld [vmem:[%s361 + $0x18] sm:$0xff]
        %402 = vmatpush.msra.mxu0 0.0
        %403 = vmatpush.msra.mxu0 0.0
        %404 = vmatpush.msra.mxu0 0.0
        %405 = vmatpush.msra.mxu0 0.0
        %406 = vmatpush.msra.mxu0 0.0
        %407 = vmatpush.msra.mxu0 0.0
        %408 = vmatpush.msra.mxu0 0.0
        %409 = vmatpush.msra.mxu0 0.0
        %410 = vmatpush.msra.mxu0 0.0
        %411 = vmatpush.msra.mxu0 0.0
        %412 = vmatpush.msra.mxu0 0.0
        %413 = vmatpush.msra.mxu0 0.0
        %414 = vmatpush.msra.mxu0 %v401
        %415 = vmatpush.msra.mxu0 %v400
        %416 = vmatpush.msra.mxu0 %v399
        %417 = vmatpush.msra.mxu0 %v398
        %418 = vmatmul.f32.gmra.mxu0 %v374
        %v419 = vpop.f32.mrf.mxu0
        %v420 = vadd.f32 0.0, %v419
        %421 = vdwg.mxu0
        %422 = vst.msk [vmem:[%s337] sm:$0xff] %vm396, %v420
        %v423 = vld [vmem:[%s366] sm:$0xff]
        %v424 = vld [vmem:[%s366 + $0x8] sm:$0xff]
        %v425 = vld [vmem:[%s366 + $0x10] sm:$0xff]
        %v426 = vld [vmem:[%s366 + $0x18] sm:$0xff]
        %427 = vmatpush.msra.mxu0 0.0
        %428 = vmatpush.msra.mxu0 0.0
        %429 = vmatpush.msra.mxu0 0.0
        %430 = vmatpush.msra.mxu0 0.0
        %431 = vmatpush.msra.mxu0 0.0
        %432 = vmatpush.msra.mxu0 0.0
        %433 = vmatpush.msra.mxu0 0.0
        %434 = vmatpush.msra.mxu0 0.0
        %435 = vmatpush.msra.mxu0 0.0
        %436 = vmatpush.msra.mxu0 0.0
        %437 = vmatpush.msra.mxu0 0.0
        %438 = vmatpush.msra.mxu0 0.0
        %439 = vmatpush.msra.mxu0 %v426
        %440 = vmatpush.msra.mxu0 %v425
        %441 = vmatpush.msra.mxu0 %v424
        %442 = vmatpush.msra.mxu0 %v423
        %443 = vmatmul.f32.gmra.mxu0 %v374
        %v444 = vpop.f32.mrf.mxu0
        %v445 = vadd.f32 0.0, %v444
        %446 = vdwg.mxu0
        %447 = vst.msk [vmem:[%s344] sm:$0xff] %vm396, %v445
        %s448 = sand.u32 %s161, 1
        %s449 = scalar_lea.sflag [#allocation3], %s448
        %s450 = sand.u32 %s161, 1
        %s451 = smul.addr %s450, 8
        %s452 = scalar_lea.vmem [#allocation2], %s451
        %s453 = sand.u32 %s24, 1
        %s454 = scalar_lea.sflag [#allocation5], %s453
        %s455 = sand.u32 %s191, 1
        %s456 = smul.addr %s455, 8
        %s457 = scalar_lea.vmem [#allocation4], %s456
        %s458 = sand.u32 %s24, 1
        %s459 = scalar_lea.sflag [#allocation5], %s458
        %s460 = sand.u32 %s221, 1
        %s461 = smul.addr %s460, 8
        %s462 = scalar_lea.vmem [#allocation6], %s461
        // Predicated region
        $region37: #{tpu_custom_call.1} parent=35 // pred_check
          %p463 = pneg %p171
        $region38: #{tpu_custom_call.1} parent=35 // pred_check_branch
          %465 = sbr.rel (%p463) target = $region40
        $region39: #{tpu_custom_call.1} parent=35 // pred_region
          %467 = vsyncadd %s449, 0
          %s468 = sadd.s32 %s30, %s31
          %s469 = smul.addr %s29, 2
          %s470 = sadd.s32 %s468, %s469
          %s471 = smul.addr %s470, 8
          %s472 = scalar_lea.hbm %s4, %s471
          %s474 = sshll.u32 %s452, 4
          %s475 = int_to_ptr.vmem [resolvable:$true] %s474
          %s476 = sshll.u32 %s472, 4
          %s477 = int_to_ptr.hbm [resolvable:$true] %s476
          %479 = dma.vmem_to_hbm [thread:$0]  %s475, 128, %s477, %s449
        $region40: #{tpu_custom_call.1} parent=35 // pred_fallthru
          _
        // Predicated region
        $region41: #{tpu_custom_call.1} parent=35 // pred_check
          %p480 = pneg %p201
        $region42: #{tpu_custom_call.1} parent=35 // pred_check_branch
          %482 = sbr.rel (%p480) target = $region44
        $region43: #{tpu_custom_call.1} parent=35 // pred_region
          %484 = vsyncadd %s454, 0
          %s485 = sadd.s32 %s30, %s31
          %s486 = smul.addr %s29, 2
          %s487 = sadd.s32 %s485, %s486
          %s488 = smul.addr %s487, 8
          %s489 = scalar_lea.hbm %s5, %s488
          %s491 = sshll.u32 %s457, 4
          %s492 = int_to_ptr.vmem [resolvable:$true] %s491
          %s493 = sshll.u32 %s489, 4
          %s494 = int_to_ptr.hbm [resolvable:$true] %s493
          %496 = dma.vmem_to_hbm [thread:$0]  %s492, 128, %s494, %s454
        $region44: #{tpu_custom_call.1} parent=35 // pred_fallthru
          _
        // Predicated region
        $region45: #{tpu_custom_call.1} parent=35 // pred_check
          %p497 = pneg %p231
        $region46: #{tpu_custom_call.1} parent=35 // pred_check_branch
          %499 = sbr.rel (%p497) target = $region48
        $region47: #{tpu_custom_call.1} parent=35 // pred_region
          %501 = vsyncadd %s459, 0
          %s502 = sadd.s32 %s30, %s31
          %s503 = smul.addr %s29, 2
          %s504 = sadd.s32 %s502, %s503
          %s505 = smul.addr %s504, 8
          %s506 = scalar_lea.hbm %s6, %s505
          %s508 = sshll.u32 %s462, 4
          %s509 = int_to_ptr.vmem [resolvable:$true] %s508
          %s510 = sshll.u32 %s506, 4
          %s511 = int_to_ptr.hbm [resolvable:$true] %s510
          %513 = dma.vmem_to_hbm [thread:$0]  %s509, 128, %s511, %s459
        $region48: #{tpu_custom_call.1} parent=35 // pred_fallthru
          _
      $region36: #{tpu_custom_call.1} parent=5 // pred_fallthru
        _
      %p514 = scmp.le.s32.totalorder 2, %s19
      // Predicated region
      $region49: #{tpu_custom_call.1} parent=5 // pred_check
        %p515 = pneg %p514
      $region50: #{tpu_custom_call.1} parent=5 // pred_check_branch
        %517 = sbr.rel (%p515) target = $region52
      $region51: #{tpu_custom_call.1} parent=5 // pred_region
        %s518 = ssub.s32 %s19, 2
        // Predicated region
        $region53: #{tpu_custom_call.1} parent=51 // pred_check
          %p519 = pneg %p177
        $region54: #{tpu_custom_call.1} parent=51 // pred_check_branch
          %521 = sbr.rel (%p519) target = $region56
        $region55: #{tpu_custom_call.1} parent=51 // pred_region
          %s522 = sand.u32 %s162, 1
          %s523 = scalar_lea.sflag [#allocation3], %s522
          %s524 = sand.u32 %s162, 1
          %s525 = smul.addr %s524, 8
          %s526 = scalar_lea.vmem [#allocation2], %s525
          %528 = dma.done %s523, 128
        $region56: #{tpu_custom_call.1} parent=51 // pred_fallthru
          _
        // Predicated region
        $region57: #{tpu_custom_call.1} parent=51 // pred_check
          %p529 = pneg %p207
        $region58: #{tpu_custom_call.1} parent=51 // pred_check_branch
          %531 = sbr.rel (%p529) target = $region60
        $region59: #{tpu_custom_call.1} parent=51 // pred_region
          %s532 = sand.u32 %s25, 1
          %s533 = scalar_lea.sflag [#allocation5], %s532
          %s534 = sand.u32 %s192, 1
          %s535 = smul.addr %s534, 8
          %s536 = scalar_lea.vmem [#allocation4], %s535
          %538 = dma.done %s533, 128
        $region60: #{tpu_custom_call.1} parent=51 // pred_fallthru
          _
        // Predicated region
        $region61: #{tpu_custom_call.1} parent=51 // pred_check
          %p539 = pneg %p237
        $region62: #{tpu_custom_call.1} parent=51 // pred_check_branch
          %541 = sbr.rel (%p539) target = $region64
        $region63: #{tpu_custom_call.1} parent=51 // pred_region
          %s542 = sand.u32 %s25, 1
          %s543 = scalar_lea.sflag [#allocation5], %s542
          %s544 = sand.u32 %s222, 1
          %s545 = smul.addr %s544, 8
          %s546 = scalar_lea.vmem [#allocation6], %s545
          %548 = dma.done %s543, 128
        $region64: #{tpu_custom_call.1} parent=51 // pred_fallthru
          _
      $region52: #{tpu_custom_call.1} parent=5 // pred_fallthru
        _
    $region6: #{tpu_custom_call.1} parent=1 // loop_footer
      %s23 = sadd.s32 1, %s19
    $region7: #{tpu_custom_call.1} parent=1 // loop_footer_branch
      %18 = sbr.rel target = $region3
    $region8: #{tpu_custom_call.1} parent=1 // loop_exit
      _
    %549 = vsyncpa [#allocation3], 1
    %s550 = scalar_lea.sflag [#allocation3], 1
    %551 = vsyncpa %s550, 1
    %552 = vsyncpa [#allocation5], 1
    %s553 = scalar_lea.sflag [#allocation5], 1
    %554 = vsyncpa %s553, 1

</llo_original>
